<compile_context>
chip_gen: v7x
topology: tpu7x:2x2x1
jax: 0.10.0
libtpu: 0.0.40
codegen_flags: <defaults>
</compile_context>

<pallas_src>
import jax
import jax.numpy as jnp
from jax.experimental import pallas as pl
from jax.experimental.pallas import tpu as pltpu

NUM_EMBEDDINGS = 1000
LANE = 128
MAX_B_TILE = 1024


def _round_up(n, m):
    return ((n + m - 1) // m) * m


def _cdiv(a, b):
    return -(-a // b)


def _choose_batch_tiling(B):
    """(b_tile, n_tiles) with b_tile % 8 == 0, b_tile * n_tiles >= B,
    n_tiles == 1 or even (so v7x's two TensorCores split the batch evenly),
    and b_tile (nearly) dividing B so almost no junk rows are processed."""
    n = _cdiv(B, MAX_B_TILE)
    if n > 1 and n % 2 == 1:
        n += 1
    b_tile = _round_up(_cdiv(B, n), 8)
    return b_tile, n


def simple_unet_kernel(x_ref, temb_ref, w1_ref, b1_ref, w2_ref, b2_ref, out_ref):
    # fc1 + time embedding + relu   (K = true input dim, lane-dense N = H_pad)
    h = jnp.dot(x_ref[...], w1_ref[...], preferred_element_type=jnp.float32)
    h = jnp.maximum(h + b1_ref[...] + temb_ref[...], 0.0)
    # fc2   (lane-dense N = D_pad so the writeback is an unmasked vst)
    out = jnp.dot(h, w2_ref[...], preferred_element_type=jnp.float32) + b2_ref[...]
    out_ref[...] = out.astype(out_ref.dtype)


def prepare_padded_params(params):
    """One-time setup (cache & reuse across calls): lane-dense padded slabs."""
    f32 = jnp.float32
    w1, b1, emb, w2, b2 = (params["w1"], params["b1"], params["emb"],
                           params["w2"], params["b2"])
    D, H = w1.shape
    H_pad = _round_up(H, LANE)
    D_pad = _round_up(D, LANE)
    return {
        # K dim of w1 stays at the true D (x is not feature-padded).
        "w1": jnp.zeros((D, H_pad), f32).at[:, :H].set(w1.astype(f32)),
        "b1": jnp.zeros((1, H_pad), f32).at[0, :H].set(b1.astype(f32)),
        "emb": jnp.zeros((NUM_EMBEDDINGS, H_pad), f32).at[:, :H].set(emb.astype(f32)),
        "w2": jnp.zeros((H_pad, D_pad), f32).at[:H, :D].set(w2.astype(f32)),
        "b2": jnp.zeros((1, D_pad), f32).at[0, :D].set(b2.astype(f32)),
    }


@jax.jit
def simple_unet_forward(x, t, padded):
    """x: (B, D) f32, t: (B,) int, padded: prepare_padded_params(...).
    Returns (B, D) f32."""
    B, D = x.shape
    w1_p, b1_p, emb_p, w2_p, b2_p = (padded["w1"], padded["b1"], padded["emb"],
                                     padded["w2"], padded["b2"])
    assert w1_p.shape[0] == D
    H_pad = w1_p.shape[1]
    D_pad = w2_p.shape[1]

    b_tile, n_tiles = _choose_batch_tiling(B)
    B_pad = b_tile * n_tiles

    x = x.astype(jnp.float32)
    t = t.astype(jnp.int32)
    if B_pad != B:
        x_p = jnp.zeros((B_pad, D), jnp.float32).at[:B].set(x)
        t_p = jnp.zeros((B_pad,), jnp.int32).at[:B].set(t)
    else:
        x_p, t_p = x, t

    # Vectorized embedding gather in the wrapper (single XLA gather on the
    # pre-padded, lane-dense table) -> streamed into the kernel per batch tile.
    temb_p = jnp.take(emb_p, t_p, axis=0)            # (B_pad, H_pad)

    grid_spec = pltpu.PrefetchScalarGridSpec(
        num_scalar_prefetch=0,
        grid=(n_tiles,),
        in_specs=[
            pl.BlockSpec((b_tile, D), lambda i: (i, 0)),        # x tile (true D)
            pl.BlockSpec((b_tile, H_pad), lambda i: (i, 0)),    # temb tile
            pl.BlockSpec((D, H_pad), lambda i: (0, 0)),         # w1 (resident)
            pl.BlockSpec((1, H_pad), lambda i: (0, 0)),         # b1
            pl.BlockSpec((H_pad, D_pad), lambda i: (0, 0)),     # w2 (resident)
            pl.BlockSpec((1, D_pad), lambda i: (0, 0)),         # b2
        ],
        out_specs=pl.BlockSpec((b_tile, D_pad), lambda i: (i, 0)),
    )

    out_p = pl.pallas_call(
        simple_unet_kernel,
        out_shape=jax.ShapeDtypeStruct((B_pad, D_pad), jnp.float32),
        grid_spec=grid_spec,
        compiler_params=pltpu.CompilerParams(
            dimension_semantics=("parallel",),
            vmem_limit_bytes=16 << 20,
        ),
    )(x_p, temb_p, w1_p, b1_p, w2_p, b2_p)

    # Padded rows (B..B_pad) hold garbage; this slice is load-bearing.
    return out_p[:B, :D]


def init_params(input_dim, hidden_dim, seed=42):
    """Deterministic synthetic init mimicking nn.Linear / nn.Embedding shapes."""
    k = jax.random.PRNGKey(seed)
    k1, k2, k3, k4, k5 = jax.random.split(k, 5)
    lim1 = 1.0 / jnp.sqrt(input_dim)
    lim2 = 1.0 / jnp.sqrt(hidden_dim)
    return {
        # stored pre-transposed: [in, out]
        "w1": jax.random.uniform(k1, (input_dim, hidden_dim), jnp.float32,
                                 -lim1, lim1),
        "b1": jax.random.uniform(k2, (hidden_dim,), jnp.float32, -lim1, lim1),
        "w2": jax.random.uniform(k3, (hidden_dim, input_dim), jnp.float32,
                                 -lim2, lim2),
        "b2": jax.random.uniform(k4, (input_dim,), jnp.float32, -lim2, lim2),
        "emb": jax.random.normal(k5, (NUM_EMBEDDINGS, hidden_dim), jnp.float32),
    }


def reference_forward(x, t, params):
    temb = jnp.take(params["emb"], t, axis=0)
    h = x @ params["w1"] + params["b1"] + temb
    h = jnp.maximum(h, 0.0)
    return h @ params["w2"] + params["b2"]


if __name__ == "__main__":
    B, D, H = 8, 16, 32
    key = jax.random.PRNGKey(0)
    kx, kt = jax.random.split(key)
    x = jax.random.normal(kx, (B, D), jnp.float32)
    t = jax.random.randint(kt, (B,), 0, NUM_EMBEDDINGS, jnp.int32)

    params = init_params(D, H)
    padded = prepare_padded_params(params)   # built once, reused across calls

    out = simple_unet_forward(x, t, padded)
    out = jax.block_until_ready(out)

    ref = reference_forward(x, t, params)
    assert out.shape == (B, D)
    assert jnp.allclose(out, ref, atol=1e-4, rtol=1e-4), "mismatch vs reference"
    print("KERNEL_OK")
</pallas_src>

<mosaic_0001>
module attributes {stable_mosaic.version = 11 : i64} {
  func.func @simple_unet_kernel(%arg0: i32, %arg1: memref<8x16xf32, #tpu.memory_space<vmem>>, %arg2: memref<8x128xf32, #tpu.memory_space<vmem>>, %arg3: memref<16x128xf32, #tpu.memory_space<vmem>>, %arg4: memref<1x128xf32, #tpu.memory_space<vmem>>, %arg5: memref<128x128xf32, #tpu.memory_space<vmem>>, %arg6: memref<1x128xf32, #tpu.memory_space<vmem>>, %arg7: memref<8x128xf32, #tpu.memory_space<vmem>>) attributes {dimension_semantics = [#tpu.dimension_semantics<parallel>], iteration_bounds = array<i64: 1>, scalar_prefetch = 0 : i64, scratch_operands = 0 : i64, tpu.core_type = #tpu.core_type<tc>, window_params = [{transform_indices = @transform_0, window_bounds = array<i64: 8, 16>}, {transform_indices = @transform_1, window_bounds = array<i64: 8, 128>}, {pipeline_mode = #tpu.pipeline_mode<synchronous>, transform_indices = @transform_2, window_bounds = array<i64: 16, 128>}, {pipeline_mode = #tpu.pipeline_mode<synchronous>, transform_indices = @transform_3, window_bounds = array<i64: 1, 128>}, {pipeline_mode = #tpu.pipeline_mode<synchronous>, transform_indices = @transform_4, window_bounds = array<i64: 128, 128>}, {pipeline_mode = #tpu.pipeline_mode<synchronous>, transform_indices = @transform_5, window_bounds = array<i64: 1, 128>}, {transform_indices = @transform_6, window_bounds = array<i64: 8, 128>}]} {
    %c0 = arith.constant 0 : index
    %c0_0 = arith.constant 0 : index
    %0 = vector.load %arg1[%c0, %c0_0] : memref<8x16xf32, #tpu.memory_space<vmem>>, vector<8x16xf32>
    %c0_1 = arith.constant 0 : index
    %c0_2 = arith.constant 0 : index
    %1 = vector.load %arg3[%c0_1, %c0_2] : memref<16x128xf32, #tpu.memory_space<vmem>>, vector<16x128xf32>
    %cst = arith.constant dense<0.000000e+00> : vector<8x128xf32>
    %2 = tpu.matmul %0, %1, %cst {dimension_numbers = #tpu.dot_dimension_numbers<[1], [0], [0], [1], [0, 0, 1, 1], [], []>} : vector<8x16xf32>, vector<16x128xf32>, vector<8x128xf32> -> vector<8x128xf32>
    %c0_3 = arith.constant 0 : index
    %c0_4 = arith.constant 0 : index
    %3 = vector.load %arg4[%c0_3, %c0_4] : memref<1x128xf32, #tpu.memory_space<vmem>>, vector<1x128xf32>
    %4 = vector.broadcast %3 : vector<1x128xf32> to vector<8x128xf32>
    %5 = arith.addf %2, %4 : vector<8x128xf32>
    %c0_5 = arith.constant 0 : index
    %c0_6 = arith.constant 0 : index
    %6 = vector.load %arg2[%c0_5, %c0_6] : memref<8x128xf32, #tpu.memory_space<vmem>>, vector<8x128xf32>
    %7 = arith.addf %5, %6 : vector<8x128xf32>
    %cst_7 = arith.constant 0.000000e+00 : f32
    %8 = vector.broadcast %cst_7 : f32 to vector<8x128xf32>
    %9 = arith.maximumf %7, %8 : vector<8x128xf32>
    %c0_8 = arith.constant 0 : index
    %c0_9 = arith.constant 0 : index
    %10 = vector.load %arg5[%c0_8, %c0_9] : memref<128x128xf32, #tpu.memory_space<vmem>>, vector<128x128xf32>
    %cst_10 = arith.constant dense<0.000000e+00> : vector<8x128xf32>
    %11 = tpu.matmul %9, %10, %cst_10 {dimension_numbers = #tpu.dot_dimension_numbers<[1], [0], [0], [1], [0, 0, 1, 1], [], []>} : vector<8x128xf32>, vector<128x128xf32>, vector<8x128xf32> -> vector<8x128xf32>
    %c0_11 = arith.constant 0 : index
    %c0_12 = arith.constant 0 : index
    %12 = vector.load %arg6[%c0_11, %c0_12] : memref<1x128xf32, #tpu.memory_space<vmem>>, vector<1x128xf32>
    %13 = vector.broadcast %12 : vector<1x128xf32> to vector<8x128xf32>
    %14 = arith.addf %11, %13 : vector<8x128xf32>
    %c0_13 = arith.constant 0 : index
    %c0_14 = arith.constant 0 : index
    %15 = vector.load %arg7[%c0_13, %c0_14] : memref<8x128xf32, #tpu.memory_space<vmem>>, vector<8x128xf32>
    tpu.vector_store %arg7[%c0_13, %c0_14], %14 {strides = array<i32>} : memref<8x128xf32, #tpu.memory_space<vmem>>, vector<8x128xf32>,
    return
  }
  func.func @transform_0(%arg0: i32) -> (i32, i32) {
    %c0_i32 = arith.constant 0 : i32
    %c0_i32_0 = arith.constant 0 : i32
    return %arg0, %c0_i32 : i32, i32
  }
  func.func @transform_1(%arg0: i32) -> (i32, i32) {
    %c0_i32 = arith.constant 0 : i32
    %c0_i32_0 = arith.constant 0 : i32
    return %arg0, %c0_i32 : i32, i32
  }
  func.func @transform_2(%arg0: i32) -> (i32, i32) {
    %c0_i32 = arith.constant 0 : i32
    %c0_i32_0 = arith.constant 0 : i32
    %c0_i32_1 = arith.constant 0 : i32
    return %c0_i32, %c0_i32_0 : i32, i32
  }
  func.func @transform_3(%arg0: i32) -> (i32, i32) {
    %c0_i32 = arith.constant 0 : i32
    %c0_i32_0 = arith.constant 0 : i32
    %c0_i32_1 = arith.constant 0 : i32
    return %c0_i32, %c0_i32_0 : i32, i32
  }
  func.func @transform_4(%arg0: i32) -> (i32, i32) {
    %c0_i32 = arith.constant 0 : i32
    %c0_i32_0 = arith.constant 0 : i32
    %c0_i32_1 = arith.constant 0 : i32
    return %c0_i32, %c0_i32_0 : i32, i32
  }
  func.func @transform_5(%arg0: i32) -> (i32, i32) {
    %c0_i32 = arith.constant 0 : i32
    %c0_i32_0 = arith.constant 0 : i32
    %c0_i32_1 = arith.constant 0 : i32
    return %c0_i32, %c0_i32_0 : i32, i32
  }
  func.func @transform_6(%arg0: i32) -> (i32, i32) {
    %c0_i32 = arith.constant 0 : i32
    %c0_i32_0 = arith.constant 0 : i32
    return %arg0, %c0_i32 : i32, i32
  }
}

</mosaic_0001>

<llo_original>
// kernel: simple_unet_forward.1
$region0: #{simple_unet_forward.1}
  #allocation0 [shape = 'u32[]', space=smem, size = 0x4, offset = 0x4, fixed_abs, tag = 'smem constant byte address 0x4 - core index']
  #allocation1 [shape = 'u32[144,128]{1,0:T(1,128)}', space=vmem, size = 0x12000, scoped, tag = 'internal scratch']
  %s0 = inlined_call_operand.vmem [shape: f32[8,16], index: 0, kind: input, shape index: {}]
  %s1 = inlined_call_operand.vmem [shape: f32[8,128], index: 1, kind: input, shape index: {}]
  %s2 = inlined_call_operand.vmem [shape: f32[16,128], index: 2, kind: input, shape index: {}]
  %s3 = inlined_call_operand.vmem [shape: f32[1,128], index: 3, kind: input, shape index: {}]
  %s4 = inlined_call_operand.hbm [shape: f32[128,128], index: 4, kind: input, shape index: {}]
  %s5 = inlined_call_operand.vmem [shape: f32[1,128], index: 5, kind: input, shape index: {}]
  %s6 = inlined_call_operand.hbm [shape: f32[8,128], index: 6, kind: output, shape index: {}]
  %s7 = sld [smem:[#allocation0]]
  $region38: #{simple_unet_forward.1} parent=0
    _
  %s9 = ssub.s32 1, %s7
  %s10 = scalar_select 0, %s9, %s7
  $region1: #{simple_unet_forward.1} parent=0
    #allocation2 [shape = 'u8[65536]{0}', space=vmem, size = 0x10000, scoped, tag = 'input window, operand 4, single buffered']
    #allocation3 [shape = 's32[1]{0}', space=sflag, size = 0x4, scoped, tag = 'scoped memory for simple_unet_forward.1']
    #allocation4 [shape = 's32[1]{0}', space=sflag, size = 0x4, scoped, tag = 'scoped memory for simple_unet_forward.1']
    #allocation5 [shape = 'u8[4096]{0}', space=vmem, size = 0x1000, scoped, tag = 'output window, operand 0, single buffered']
    %11 = vsyncpa [#allocation3], 0
    %12 = vsyncpa [#allocation4], 0
    // Predicated region
    $region2: #{simple_unet_forward.1} parent=1 // pred_check
      _
    $region3: #{simple_unet_forward.1} parent=1 // pred_check_branch
      %14 = sbr.rel (0) target = $region5
    $region4: #{simple_unet_forward.1} parent=1 // pred_region
      _
    $region5: #{simple_unet_forward.1} parent=1 // pred_fallthru
      _
    // Predicated region
    $region6: #{simple_unet_forward.1} parent=1 // pred_check
      _
    $region7: #{simple_unet_forward.1} parent=1 // pred_check_branch
      %16 = sbr.rel (0) target = $region9
    $region8: #{simple_unet_forward.1} parent=1 // pred_region
      _
    $region9: #{simple_unet_forward.1} parent=1 // pred_fallthru
      _
    // Predicated region
    $region10: #{simple_unet_forward.1} parent=1 // pred_check
      _
    $region11: #{simple_unet_forward.1} parent=1 // pred_check_branch
      %18 = sbr.rel (0) target = $region13
    $region12: #{simple_unet_forward.1} parent=1 // pred_region
      _
    $region13: #{simple_unet_forward.1} parent=1 // pred_fallthru
      _
    // Predicated region
    $region14: #{simple_unet_forward.1} parent=1 // pred_check
      _
    $region15: #{simple_unet_forward.1} parent=1 // pred_check_branch
      %20 = sbr.rel (0) target = $region17
    $region16: #{simple_unet_forward.1} parent=1 // pred_region
      _
    $region17: #{simple_unet_forward.1} parent=1 // pred_fallthru
      _
    // Predicated region
    $region18: #{simple_unet_forward.1} parent=1 // pred_check
      _
    $region19: #{simple_unet_forward.1} parent=1 // pred_check_branch
      %22 = sbr.rel (0) target = $region21
    $region20: #{simple_unet_forward.1} parent=1 // pred_region
      %s24 = ssub.s32 2048, 2048
      %25 = vsyncadd [#allocation3], %s24
      %s26 = sshll.u32 [#allocation2], 4
      %s27 = int_to_ptr.vmem [resolvable:$true] %s26
      %32 = dma.hbm_to_vmem [thread:$0]  %s4, 2048, %s27, [#allocation3], 128, 128, 8
    $region21: #{simple_unet_forward.1} parent=1 // pred_fallthru
      _
    // Predicated region
    $region22: #{simple_unet_forward.1} parent=1 // pred_check
      _
    $region23: #{simple_unet_forward.1} parent=1 // pred_check_branch
      %34 = sbr.rel (0) target = $region25
    $region24: #{simple_unet_forward.1} parent=1 // pred_region
      _
    $region25: #{simple_unet_forward.1} parent=1 // pred_fallthru
      _
    // Predicated region
    $region26: #{simple_unet_forward.1} parent=1 // pred_check
      _
    $region27: #{simple_unet_forward.1} parent=1 // pred_check_branch
      %36 = sbr.rel (0) target = $region29
    $region28: #{simple_unet_forward.1} parent=1 // pred_region
      %37 = dma.done [#allocation3], 2048
    $region29: #{simple_unet_forward.1} parent=1 // pred_fallthru
      _
    %v38 = vld [vmem:[%s0] sm:$0xff]
    %v39 = vld [vmem:[%s2] sm:$0xff]
    %v40 = vld [vmem:[%s2 + $0x8] sm:$0xff]
    %v41 = vld [vmem:[%s3] sm:$0x1]
    %v43 = vlaneseq
    %v44 = vshrl.u32 %v43, 7
    %v45 = vsub.s32 0, %v44
    %v46 = vrot.slane %v41, %v45
    %vm48 = vcmask 130048
    %v50 = vsel %vm48, %v38, 0
    %52 = vmatprep.subr.mxu0 0.0
    %53 = vmatpush1.msra.mxu0 %v39
    %54 = vmatprep.subr.mxu0 0.0
    %55 = vmatpush1.msra.mxu0 %v40
    %56 = vmatprep.subr.mxu0 0.0
    %57 = vmatpush1.msra.mxu0 0.0
    %58 = vmatprep.subr.mxu0 0.0
    %59 = vmatpush1.msra.mxu0 0.0
    %60 = vmatprep.subr.mxu0 0.0
    %61 = vmatpush1.msra.mxu0 0.0
    %62 = vmatprep.subr.mxu0 0.0
    %63 = vmatpush1.msra.mxu0 0.0
    %64 = vmatprep.subr.mxu0 0.0
    %65 = vmatpush1.msra.mxu0 0.0
    %66 = vmatprep.subr.mxu0 0.0
    %67 = vmatpush1.msra.mxu0 0.0
    %68 = vmatprep.subr.mxu0 0.0
    %69 = vmatpush1.msra.mxu0 0.0
    %70 = vmatprep.subr.mxu0 0.0
    %71 = vmatpush1.msra.mxu0 0.0
    %72 = vmatprep.subr.mxu0 0.0
    %73 = vmatpush1.msra.mxu0 0.0
    %74 = vmatprep.subr.mxu0 0.0
    %75 = vmatpush1.msra.mxu0 0.0
    %76 = vmatprep.subr.mxu0 0.0
    %77 = vmatpush1.msra.mxu0 0.0
    %78 = vmatprep.subr.mxu0 0.0
    %79 = vmatpush1.msra.mxu0 0.0
    %80 = vmatprep.subr.mxu0 0.0
    %81 = vmatpush1.msra.mxu0 0.0
    %82 = vmatprep.subr.mxu0 0.0
    %83 = vmatpush1.msra.mxu0 0.0
    %84 = vmatprep.subr.mxu0 0.0
    %85 = vmatpush1.msra.mxu0 0.0
    %86 = vmatprep.subr.mxu0 0.0
    %87 = vmatpush1.msra.mxu0 0.0
    %88 = vmatprep.subr.mxu0 0.0
    %89 = vmatpush1.msra.mxu0 0.0
    %90 = vmatprep.subr.mxu0 0.0
    %91 = vmatpush1.msra.mxu0 0.0
    %92 = vmatprep.subr.mxu0 0.0
    %93 = vmatpush1.msra.mxu0 0.0
    %94 = vmatprep.subr.mxu0 0.0
    %95 = vmatpush1.msra.mxu0 0.0
    %96 = vmatprep.subr.mxu0 0.0
    %97 = vmatpush1.msra.mxu0 0.0
    %98 = vmatprep.subr.mxu0 0.0
    %99 = vmatpush1.msra.mxu0 0.0
    %100 = vmatprep.subr.mxu0 0.0
    %101 = vmatpush1.msra.mxu0 0.0
    %102 = vmatprep.subr.mxu0 0.0
    %103 = vmatpush1.msra.mxu0 0.0
    %104 = vmatprep.subr.mxu0 0.0
    %105 = vmatpush1.msra.mxu0 0.0
    %106 = vmatprep.subr.mxu0 0.0
    %107 = vmatpush1.msra.mxu0 0.0
    %108 = vmatprep.subr.mxu0 0.0
    %109 = vmatpush1.msra.mxu0 0.0
    %110 = vmatprep.subr.mxu0 0.0
    %111 = vmatpush1.msra.mxu0 0.0
    %112 = vmatprep.subr.mxu0 0.0
    %113 = vmatpush1.msra.mxu0 0.0
    %114 = vmatprep.subr.mxu0 0.0
    %115 = vmatpush1.msra.mxu0 0.0
    %116 = vmatprep.mubr.f32.mxu0 0.0
    %117 = vmatmul.mubr.f32.gmra.mrb[0].mxu0 %v50
    %v118 = vpop.f32.mrb[0].mxu0
    %v119 = vadd.f32 %v46, %v118
    %v120 = vpop.f32.mrb[0].mxu0
    %121 = vdwg.mxu0
    %v122 = vld [vmem:[%s1] sm:$0xff]
    %v123 = vadd.f32 %v119, %v122
    %v124 = vmax.f32 %v123, 0.0
    %v125 = vld [vmem:[#allocation2] sm:$0xff]
    %v126 = vld [vmem:[#allocation2 + $0x8] sm:$0xff]
    %v127 = vld [vmem:[#allocation2 + $0x10] sm:$0xff]
    %v128 = vld [vmem:[#allocation2 + $0x18] sm:$0xff]
    %v129 = vld [vmem:[#allocation2 + $0x20] sm:$0xff]
    %v130 = vld [vmem:[#allocation2 + $0x28] sm:$0xff]
    %v131 = vld [vmem:[#allocation2 + $0x30] sm:$0xff]
    %v132 = vld [vmem:[#allocation2 + $0x38] sm:$0xff]
    %v133 = vld [vmem:[#allocation2 + $0x40] sm:$0xff]
    %v134 = vld [vmem:[#allocation2 + $0x48] sm:$0xff]
    %v135 = vld [vmem:[#allocation2 + $0x50] sm:$0xff]
    %v136 = vld [vmem:[#allocation2 + $0x58] sm:$0xff]
    %v137 = vld [vmem:[#allocation2 + $0x60] sm:$0xff]
    %v138 = vld [vmem:[#allocation2 + $0x68] sm:$0xff]
    %v139 = vld [vmem:[#allocation2 + $0x70] sm:$0xff]
    %v140 = vld [vmem:[#allocation2 + $0x78] sm:$0xff]
    %v141 = vld [vmem:[%s5] sm:$0x1]
    %v143 = vlaneseq
    %v144 = vshrl.u32 %v143, 7
    %v145 = vsub.s32 0, %v144
    %v146 = vrot.slane %v141, %v145
    %148 = vmatprep.subr.mxu0 0.0
    %149 = vmatpush1.msra.mxu0 %v125
    %150 = vmatprep.subr.mxu0 0.0
    %151 = vmatpush1.msra.mxu0 %v126
    %152 = vmatprep.subr.mxu0 0.0
    %153 = vmatpush1.msra.mxu0 %v127
    %154 = vmatprep.subr.mxu0 0.0
    %155 = vmatpush1.msra.mxu0 %v128
    %156 = vmatprep.subr.mxu0 0.0
    %157 = vmatpush1.msra.mxu0 %v129
    %158 = vmatprep.subr.mxu0 0.0
    %159 = vmatpush1.msra.mxu0 %v130
    %160 = vmatprep.subr.mxu0 0.0
    %161 = vmatpush1.msra.mxu0 %v131
    %162 = vmatprep.subr.mxu0 0.0
    %163 = vmatpush1.msra.mxu0 %v132
    %164 = vmatprep.subr.mxu0 0.0
    %165 = vmatpush1.msra.mxu0 %v133
    %166 = vmatprep.subr.mxu0 0.0
    %167 = vmatpush1.msra.mxu0 %v134
    %168 = vmatprep.subr.mxu0 0.0
    %169 = vmatpush1.msra.mxu0 %v135
    %170 = vmatprep.subr.mxu0 0.0
    %171 = vmatpush1.msra.mxu0 %v136
    %172 = vmatprep.subr.mxu0 0.0
    %173 = vmatpush1.msra.mxu0 %v137
    %174 = vmatprep.subr.mxu0 0.0
    %175 = vmatpush1.msra.mxu0 %v138
    %176 = vmatprep.subr.mxu0 0.0
    %177 = vmatpush1.msra.mxu0 %v139
    %178 = vmatprep.subr.mxu0 0.0
    %179 = vmatpush1.msra.mxu0 %v140
    %180 = vmatprep.subr.mxu0 0.0
    %181 = vmatpush1.msra.mxu0 0.0
    %182 = vmatprep.subr.mxu0 0.0
    %183 = vmatpush1.msra.mxu0 0.0
    %184 = vmatprep.subr.mxu0 0.0
    %185 = vmatpush1.msra.mxu0 0.0
    %186 = vmatprep.subr.mxu0 0.0
    %187 = vmatpush1.msra.mxu0 0.0
    %188 = vmatprep.subr.mxu0 0.0
    %189 = vmatpush1.msra.mxu0 0.0
    %190 = vmatprep.subr.mxu0 0.0
    %191 = vmatpush1.msra.mxu0 0.0
    %192 = vmatprep.subr.mxu0 0.0
    %193 = vmatpush1.msra.mxu0 0.0
    %194 = vmatprep.subr.mxu0 0.0
    %195 = vmatpush1.msra.mxu0 0.0
    %196 = vmatprep.subr.mxu0 0.0
    %197 = vmatpush1.msra.mxu0 0.0
    %198 = vmatprep.subr.mxu0 0.0
    %199 = vmatpush1.msra.mxu0 0.0
    %200 = vmatprep.subr.mxu0 0.0
    %201 = vmatpush1.msra.mxu0 0.0
    %202 = vmatprep.subr.mxu0 0.0
    %203 = vmatpush1.msra.mxu0 0.0
    %204 = vmatprep.subr.mxu0 0.0
    %205 = vmatpush1.msra.mxu0 0.0
    %206 = vmatprep.subr.mxu0 0.0
    %207 = vmatpush1.msra.mxu0 0.0
    %208 = vmatprep.subr.mxu0 0.0
    %209 = vmatpush1.msra.mxu0 0.0
    %210 = vmatprep.subr.mxu0 0.0
    %211 = vmatpush1.msra.mxu0 0.0
    %212 = vmatprep.mubr.f32.mxu0 0.0
    %213 = vmatmul.mubr.f32.gmra.mrb[0].mxu0 %v124
    %v214 = vpop.f32.mrb[0].mxu0
    %v215 = vadd.f32 %v146, %v214
    %v216 = vpop.f32.mrb[0].mxu0
    %217 = vdwg.mxu0
    %218 = vst [vmem:[#allocation5] sm:$0xff] %v215
    // Predicated region
    $region30: #{simple_unet_forward.1} parent=1 // pred_check
      _
    $region31: #{simple_unet_forward.1} parent=1 // pred_check_branch
      %220 = sbr.rel (0) target = $region33
    $region32: #{simple_unet_forward.1} parent=1 // pred_region
      %s222 = ssub.s32 128, 128
      %223 = vsyncadd [#allocation4], %s222
      %s225 = sshll.u32 [#allocation5], 4
      %s226 = int_to_ptr.vmem [resolvable:$true] %s225
      %228 = dma.vmem_to_hbm [thread:$0]  %s226, 128, %s6, [#allocation4]
    $region33: #{simple_unet_forward.1} parent=1 // pred_fallthru
      _
    // Predicated region
    $region34: #{simple_unet_forward.1} parent=1 // pred_check
      _
    $region35: #{simple_unet_forward.1} parent=1 // pred_check_branch
      %230 = sbr.rel (0) target = $region37
    $region36: #{simple_unet_forward.1} parent=1 // pred_region
      %231 = dma.done [#allocation4], 128
    $region37: #{simple_unet_forward.1} parent=1 // pred_fallthru
      _
    %232 = vsyncpa [#allocation3], 1
    %233 = vsyncpa [#allocation4], 1

</llo_original>
